<compile_context>
chip_gen: v7x
topology: tpu7x:2x2x1
jax: 0.10.0
libtpu: 0.0.40
codegen_flags: <defaults>
</compile_context>

<pallas_src>
import functools

import jax
import jax.numpy as jnp
from jax.experimental import pallas as pl
from jax.experimental.pallas import tpu as pltpu

LN_EPS = 1e-5


def _round_up(n: int, m: int) -> int:
    return ((n + m - 1) // m) * m


def _hw_info():
    """Best-effort generation query: (vmem capacity bytes, #TensorCores, is_v5)."""
    vmem_cap = 128 << 20
    try:
        vmem_cap = int(getattr(pltpu.get_tpu_info(), "vmem_capacity_bytes",
                               vmem_cap))
    except Exception:
        pass
    kind = ""
    try:
        kind = jax.devices()[0].device_kind.lower()
    except Exception:
        pass
    num_tc = 2 if ("v7" in kind or vmem_cap <= (64 << 20)) else 1
    is_v5 = "v5" in kind
    return vmem_cap, num_tc, is_v5


def _plan_tiles(B, H, x_bytes, out_bytes, block_m, chunk_k):
    """Pick (batch tile bm, hidden-dim chunk tk, vmem_limit_bytes)."""
    vmem_cap, num_tc, is_v5 = _hw_info()
    # Request <= ~85% of physical VMEM; on 2-TC parts (v7x, 64 MiB/TC) cap at
    # 56 MiB so Mosaic internal scratch / temporaries keep headroom.
    if num_tc >= 2:
        vmem_limit_cap = min(int(vmem_cap * 0.85), 56 << 20)
    else:
        vmem_limit_cap = int(vmem_cap * 0.85)
    tile_budget = int(vmem_limit_cap * 0.8)

    if block_m is None:
        block_m = 128 if is_v5 else 256        # v5e: 128-wide MXU; v6e/v7x: 256
    bm = max(8, min(_round_up(int(block_m), 8), _round_up(B, 8)))
    if num_tc >= 2:
        # keep >=2 grid steps on the "parallel" batch axis so both TCs get work
        bm = min(bm, max(8, _round_up(-(-B // num_tc), 8)))

    def est(bm_, tk_):
        nb = 1 if tk_ == H else 2              # full-resident weights single-buffer
        return (2 * bm_ * H * (x_bytes + out_bytes)   # x / out double buffers
                + bm_ * H * 4                          # f32 accumulator scratch
                + nb * (2 * H * tk_ * 2 + tk_ * 4)     # bf16 W1/W2 chunks + b1 chunk
                + 3 * H * 4)                           # b2 / gamma / beta

    if chunk_k is not None:
        tk = int(chunk_k)
        if H % tk != 0 or (tk != H and tk % 128 != 0):
            raise ValueError("chunk_k must divide H and be a multiple of 128")
    else:
        cands = ([c for c in range(H, 0, -128) if H % c == 0]
                 if H % 128 == 0 else [H])
        tk = None
        while tk is None:
            for c in cands:                    # largest chunk that fits wins
                if est(bm, c) <= tile_budget:
                    tk = c
                    break
            if tk is None:
                if bm <= 8:
                    tk = cands[-1]             # best effort at smallest tiles
                else:
                    bm = max(8, _round_up(bm // 2, 8))

    vmem_limit = int(min(vmem_limit_cap, max(16 << 20, 2 * est(bm, tk))))
    return bm, tk, vmem_limit


def residual_block_kernel(x_ref, w1_ref, b1_ref, w2_ref, b2_ref,
                          gamma_ref, beta_ref, o_ref, acc_ref):
    """One (bm, H) batch tile x one hidden-dim chunk of the intermediate."""
    k = pl.program_id(1)

    @pl.when(k == 0)
    def _():
        acc_ref[...] = jnp.zeros_like(acc_ref)

    xv = x_ref[...]                                   # read x once
    x_bf16 = xv.astype(jnp.bfloat16)

    # Linear 1 (chunk of output features) + ReLU.  Dropout = identity (eval).
    h = jnp.dot(x_bf16, w1_ref[...], preferred_element_type=jnp.float32)
    h = jnp.maximum(h + b1_ref[...], 0.0)

    # Linear 2 partial product over this chunk of the contraction dim.
    acc_ref[...] += jnp.dot(h.astype(jnp.bfloat16), w2_ref[...],
                            preferred_element_type=jnp.float32)

    @pl.when(k == pl.num_programs(1) - 1)
    def _():
        # Residual connection + LayerNorm + ReLU epilogue, all f32.
        z = acc_ref[...] + b2_ref[...] + xv.astype(jnp.float32)
        mean = jnp.mean(z, axis=-1, keepdims=True)
        mean_sq = jnp.mean(z * z, axis=-1, keepdims=True)
        var = mean_sq - mean * mean                   # one-pass variance
        zn = (z - mean) * jax.lax.rsqrt(var + LN_EPS)
        zn = zn * gamma_ref[...] + beta_ref[...]
        o_ref[...] = jnp.maximum(zn, 0.0).astype(o_ref.dtype)


def pack_residual_block_params(w1, b1, w2, b2, gamma, beta):
    """One-time weight packing (do this at model load, NOT per call):
    transpose PyTorch (out, in) Linear weights and cast to bf16; reshape the
    per-feature vectors to lane-dense (1, H) f32 rows."""
    H = w1.shape[0]
    return (jnp.asarray(w1).T.astype(jnp.bfloat16),
            jnp.asarray(b1).reshape(1, H).astype(jnp.float32),
            jnp.asarray(w2).T.astype(jnp.bfloat16),
            jnp.asarray(b2).reshape(1, H).astype(jnp.float32),
            jnp.asarray(gamma).reshape(1, H).astype(jnp.float32),
            jnp.asarray(beta).reshape(1, H).astype(jnp.float32))


@functools.partial(jax.jit, static_argnames=("block_m", "chunk_k"))
def residual_block(x, w1_t, b1, w2_t, b2, gamma, beta, *,
                   block_m=None, chunk_k=None):
    """Fused ResidualBlock forward.

    Args:
      x:                 (B, H) activations (f32 or bf16 -- output matches).
      w1_t, b1, w2_t, b2, gamma, beta: outputs of pack_residual_block_params.
      block_m:           batch tile override (None = generation default).
      chunk_k:           hidden-dim chunk override (None = auto from VMEM).
    """
    B, H = x.shape
    x_bytes = jnp.dtype(x.dtype).itemsize
    out_bytes = x_bytes
    bm, tk, vmem_limit = _plan_tiles(B, H, x_bytes, out_bytes, block_m, chunk_k)
    n_chunks = H // tk
    grid = (pl.cdiv(B, bm), n_chunks)

    single = pl.Buffered(1)
    # Streamed weight chunks stay double-buffered (DMA overlaps MXU); when the
    # whole weight is resident (single chunk) don't pay 2x VMEM for it.
    w_mode = single if n_chunks == 1 else None

    def spec(shape, index_map, mode=None):
        if mode is None:
            return pl.BlockSpec(shape, index_map)
        return pl.BlockSpec(shape, index_map, pipeline_mode=mode)

    cost = pl.CostEstimate(
        flops=4 * B * H * H + 10 * B * H,
        transcendentals=B,
        bytes_accessed=B * H * (x_bytes + out_bytes) + 2 * H * H * 2 + 5 * H * 4,
    )

    return pl.pallas_call(
        residual_block_kernel,
        out_shape=jax.ShapeDtypeStruct((B, H), x.dtype),
        grid_spec=pltpu.PrefetchScalarGridSpec(
            num_scalar_prefetch=0,
            grid=grid,
            in_specs=[
                spec((bm, H), lambda i, k: (i, 0)),              # x tile (resident over k)
                spec((H, tk), lambda i, k: (0, k), w_mode),      # W1^T column chunk (bf16)
                spec((1, tk), lambda i, k: (0, k), w_mode),      # b1 chunk
                spec((tk, H), lambda i, k: (k, 0), w_mode),      # W2^T row chunk (bf16)
                spec((1, H), lambda i, k: (0, 0), single),       # b2
                spec((1, H), lambda i, k: (0, 0), single),       # gamma
                spec((1, H), lambda i, k: (0, 0), single),       # beta
            ],
            out_specs=pl.BlockSpec((bm, H), lambda i, k: (i, 0)),  # lane-dense
            scratch_shapes=[pltpu.VMEM((bm, H), jnp.float32)],     # f32 accumulator
        ),
        compiler_params=pltpu.CompilerParams(
            dimension_semantics=("parallel", "arbitrary"),
            vmem_limit_bytes=vmem_limit),
        cost_estimate=cost,
    )(x, w1_t, b1, w2_t, b2, gamma, beta)


def reference(x, w1, b1, w2, b2, gamma, beta, *, matmul_dtype=jnp.float32):
    """Pure-JAX reference (PyTorch-layout weights).  matmul_dtype builds a
    precision-matched reference for the bf16-operand kernel."""
    xm = x.astype(matmul_dtype)
    h = jnp.dot(xm, w1.T.astype(matmul_dtype),
                preferred_element_type=jnp.float32) + b1
    h = jnp.maximum(h, 0.0)
    y = jnp.dot(h.astype(matmul_dtype), w2.T.astype(matmul_dtype),
                preferred_element_type=jnp.float32) + b2
    z = y + x
    mean = jnp.mean(z, axis=-1, keepdims=True)
    var = jnp.mean((z - mean) ** 2, axis=-1, keepdims=True)
    zn = (z - mean) / jnp.sqrt(var + LN_EPS)
    return jnp.maximum(zn * gamma + beta, 0.0)


if __name__ == "__main__":
    def make_params(key, H):
        kw1, kb1, kw2, kb2 = jax.random.split(key, 4)
        scale = 1.0 / float(H) ** 0.5
        w1 = jax.random.uniform(kw1, (H, H), jnp.float32, -scale, scale)
        b1 = jax.random.uniform(kb1, (H,), jnp.float32, -scale, scale)
        w2 = jax.random.uniform(kw2, (H, H), jnp.float32, -scale, scale)
        b2 = jax.random.uniform(kb2, (H,), jnp.float32, -scale, scale)
        gamma = jnp.ones((H,), jnp.float32)   # nn.LayerNorm default weight
        beta = jnp.zeros((H,), jnp.float32)   # nn.LayerNorm default bias
        return w1, b1, w2, b2, gamma, beta

    def check(B, H, key, **kw):
        kx, kp = jax.random.split(key)
        x = jax.random.normal(kx, (B, H), dtype=jnp.float32)
        w1, b1, w2, b2, gamma, beta = make_params(kp, H)
        packed = pack_residual_block_params(w1, b1, w2, b2, gamma, beta)
        out = jax.block_until_ready(residual_block(x, *packed, **kw))
        assert out.shape == (B, H)
        ref_bf16 = reference(x, w1, b1, w2, b2, gamma, beta,
                             matmul_dtype=jnp.bfloat16)
        ref_f32 = reference(x, w1, b1, w2, b2, gamma, beta,
                            matmul_dtype=jnp.float32)
        assert jnp.allclose(out, ref_bf16, atol=2e-3, rtol=2e-3), \
            f"mismatch vs bf16-matmul reference (B={B}, H={H})"
        assert jnp.allclose(out, ref_f32, atol=5e-2, rtol=5e-2), \
            f"mismatch vs f32 reference (B={B}, H={H})"

    key = jax.random.PRNGKey(0)
    k1, k2, k3 = jax.random.split(key, 3)
    # Small baseline: batch=8, hidden_dim=128, single chunk, auto tiles.
    check(8, 128, k1)
    # Ragged batch: partial last tile via masked stores (no wrapper pad copy).
    check(12, 128, k2, block_m=8)
    # Multi-chunk hidden-dim streaming path (accumulator + pl.when finalize).
    check(8, 256, k3, chunk_k=128)

    print("KERNEL_OK")
</pallas_src>

<mosaic_0001>
module attributes {stable_mosaic.version = 11 : i64} {
  func.func @residual_block_kernel(%arg0: i32, %arg1: i32, %arg2: memref<8x128xf32, #tpu.memory_space<vmem>>, %arg3: memref<128x128xbf16, #tpu.memory_space<vmem>>, %arg4: memref<1x128xf32, #tpu.memory_space<vmem>>, %arg5: memref<128x128xbf16, #tpu.memory_space<vmem>>, %arg6: memref<1x128xf32, #tpu.memory_space<vmem>>, %arg7: memref<1x128xf32, #tpu.memory_space<vmem>>, %arg8: memref<1x128xf32, #tpu.memory_space<vmem>>, %arg9: memref<8x128xf32, #tpu.memory_space<vmem>>, %arg10: memref<8x128xf32, #tpu.memory_space<vmem>>) attributes {dimension_semantics = [#tpu.dimension_semantics<parallel>, #tpu.dimension_semantics<arbitrary>], iteration_bounds = array<i64: 1, 1>, scalar_prefetch = 0 : i64, scratch_operands = 1 : i64, tpu.core_type = #tpu.core_type<tc>, window_params = [{transform_indices = @transform_0, window_bounds = array<i64: 8, 128>}, {pipeline_mode = #tpu.pipeline_mode<synchronous>, transform_indices = @transform_1, window_bounds = array<i64: 128, 128>}, {pipeline_mode = #tpu.pipeline_mode<synchronous>, transform_indices = @transform_2, window_bounds = array<i64: 1, 128>}, {pipeline_mode = #tpu.pipeline_mode<synchronous>, transform_indices = @transform_3, window_bounds = array<i64: 128, 128>}, {pipeline_mode = #tpu.pipeline_mode<synchronous>, transform_indices = @transform_4, window_bounds = array<i64: 1, 128>}, {pipeline_mode = #tpu.pipeline_mode<synchronous>, transform_indices = @transform_5, window_bounds = array<i64: 1, 128>}, {pipeline_mode = #tpu.pipeline_mode<synchronous>, transform_indices = @transform_6, window_bounds = array<i64: 1, 128>}, {transform_indices = @transform_7, window_bounds = array<i64: 8, 128>}]} {
    %c0_i32 = arith.constant 0 : i32
    %0 = arith.cmpi eq, %arg1, %c0_i32 : i32
    %1 = arith.extui %0 : i1 to i32
    %c0_i32_0 = arith.constant 0 : i32
    %2 = arith.cmpi ne, %1, %c0_i32_0 : i32
    scf.if %2 {
      %cst_16 = arith.constant 0.000000e+00 : f32
      %21 = vector.broadcast %cst_16 : f32 to vector<8x128xf32>
      %c0_17 = arith.constant 0 : index
      %c0_18 = arith.constant 0 : index
      %22 = vector.load %arg10[%c0_17, %c0_18] : memref<8x128xf32, #tpu.memory_space<vmem>>, vector<8x128xf32>
      tpu.vector_store %arg10[%c0_17, %c0_18], %21 {strides = array<i32>} : memref<8x128xf32, #tpu.memory_space<vmem>>, vector<8x128xf32>,
    } else {
    }
    %c0 = arith.constant 0 : index
    %c0_1 = arith.constant 0 : index
    %3 = vector.load %arg2[%c0, %c0_1] : memref<8x128xf32, #tpu.memory_space<vmem>>, vector<8x128xf32>
    %4 = arith.truncf %3 : vector<8x128xf32> to vector<8x128xbf16>
    %c0_2 = arith.constant 0 : index
    %c0_3 = arith.constant 0 : index
    %5 = vector.load %arg3[%c0_2, %c0_3] : memref<128x128xbf16, #tpu.memory_space<vmem>>, vector<128x128xbf16>
    %cst = arith.constant dense<0.000000e+00> : vector<8x128xf32>
    %6 = tpu.matmul %4, %5, %cst {dimension_numbers = #tpu.dot_dimension_numbers<[1], [0], [0], [1], [0, 0, 1, 1], [], []>} : vector<8x128xbf16>, vector<128x128xbf16>, vector<8x128xf32> -> vector<8x128xf32>
    %c0_4 = arith.constant 0 : index
    %c0_5 = arith.constant 0 : index
    %7 = vector.load %arg4[%c0_4, %c0_5] : memref<1x128xf32, #tpu.memory_space<vmem>>, vector<1x128xf32>
    %8 = vector.broadcast %7 : vector<1x128xf32> to vector<8x128xf32>
    %9 = arith.addf %6, %8 : vector<8x128xf32>
    %cst_6 = arith.constant 0.000000e+00 : f32
    %10 = vector.broadcast %cst_6 : f32 to vector<8x128xf32>
    %11 = arith.maximumf %9, %10 : vector<8x128xf32>
    %c0_7 = arith.constant 0 : index
    %c0_8 = arith.constant 0 : index
    %12 = vector.load %arg10[%c0_7, %c0_8] : memref<8x128xf32, #tpu.memory_space<vmem>>, vector<8x128xf32>
    %13 = arith.truncf %11 : vector<8x128xf32> to vector<8x128xbf16>
    %c0_9 = arith.constant 0 : index
    %c0_10 = arith.constant 0 : index
    %14 = vector.load %arg5[%c0_9, %c0_10] : memref<128x128xbf16, #tpu.memory_space<vmem>>, vector<128x128xbf16>
    %cst_11 = arith.constant dense<0.000000e+00> : vector<8x128xf32>
    %15 = tpu.matmul %13, %14, %cst_11 {dimension_numbers = #tpu.dot_dimension_numbers<[1], [0], [0], [1], [0, 0, 1, 1], [], []>} : vector<8x128xbf16>, vector<128x128xbf16>, vector<8x128xf32> -> vector<8x128xf32>
    %16 = arith.addf %12, %15 : vector<8x128xf32>
    %c0_12 = arith.constant 0 : index
    %c0_13 = arith.constant 0 : index
    %17 = vector.load %arg10[%c0_12, %c0_13] : memref<8x128xf32, #tpu.memory_space<vmem>>, vector<8x128xf32>
    tpu.vector_store %arg10[%c0_12, %c0_13], %16 {strides = array<i32>} : memref<8x128xf32, #tpu.memory_space<vmem>>, vector<8x128xf32>,
    %c0_i32_14 = arith.constant 0 : i32
    %18 = arith.cmpi eq, %arg1, %c0_i32_14 : i32
    %19 = arith.extui %18 : i1 to i32
    %c0_i32_15 = arith.constant 0 : i32
    %20 = arith.cmpi ne, %19, %c0_i32_15 : i32
    scf.if %20 {
      %c0_16 = arith.constant 0 : index
      %c0_17 = arith.constant 0 : index
      %21 = vector.load %arg10[%c0_16, %c0_17] : memref<8x128xf32, #tpu.memory_space<vmem>>, vector<8x128xf32>
      %c0_18 = arith.constant 0 : index
      %c0_19 = arith.constant 0 : index
      %22 = vector.load %arg6[%c0_18, %c0_19] : memref<1x128xf32, #tpu.memory_space<vmem>>, vector<1x128xf32>
      %23 = vector.broadcast %22 : vector<1x128xf32> to vector<8x128xf32>
      %24 = arith.addf %21, %23 : vector<8x128xf32>
      %25 = arith.addf %24, %3 : vector<8x128xf32>
      %cst_20 = arith.constant dense<0.000000e+00> : vector<8xf32>
      %26 = vector.multi_reduction <add>, %25, %cst_20 [1] : vector<8x128xf32> to vector<8xf32>
      %27 = vector.shape_cast %26 : vector<8xf32> to vector<8x1xf32>
      %cst_21 = arith.constant 1.280000e+02 : f32
      %28 = vector.broadcast %cst_21 : f32 to vector<8x1xf32>
      %29 = arith.divf %27, %28 : vector<8x1xf32>
      %30 = arith.mulf %25, %25 : vector<8x128xf32>
      %cst_22 = arith.constant dense<0.000000e+00> : vector<8xf32>
      %31 = vector.multi_reduction <add>, %30, %cst_22 [1] : vector<8x128xf32> to vector<8xf32>
      %32 = vector.shape_cast %31 : vector<8xf32> to vector<8x1xf32>
      %cst_23 = arith.constant 1.280000e+02 : f32
      %33 = vector.broadcast %cst_23 : f32 to vector<8x1xf32>
      %34 = arith.divf %32, %33 : vector<8x1xf32>
      %35 = arith.mulf %29, %29 : vector<8x1xf32>
      %36 = arith.subf %34, %35 : vector<8x1xf32>
      %37 = vector.broadcast %29 : vector<8x1xf32> to vector<8x128xf32>
      %38 = arith.subf %25, %37 : vector<8x128xf32>
      %cst_24 = arith.constant 9.99999974E-6 : f32
      %39 = vector.broadcast %cst_24 : f32 to vector<8x1xf32>
      %40 = arith.addf %36, %39 : vector<8x1xf32>
      %41 = math.rsqrt %40 : vector<8x1xf32>
      %42 = vector.broadcast %41 : vector<8x1xf32> to vector<8x128xf32>
      %43 = arith.mulf %38, %42 : vector<8x128xf32>
      %c0_25 = arith.constant 0 : index
      %c0_26 = arith.constant 0 : index
      %44 = vector.load %arg7[%c0_25, %c0_26] : memref<1x128xf32, #tpu.memory_space<vmem>>, vector<1x128xf32>
      %45 = vector.broadcast %44 : vector<1x128xf32> to vector<8x128xf32>
      %46 = arith.mulf %43, %45 : vector<8x128xf32>
      %c0_27 = arith.constant 0 : index
      %c0_28 = arith.constant 0 : index
      %47 = vector.load %arg8[%c0_27, %c0_28] : memref<1x128xf32, #tpu.memory_space<vmem>>, vector<1x128xf32>
      %48 = vector.broadcast %47 : vector<1x128xf32> to vector<8x128xf32>
      %49 = arith.addf %46, %48 : vector<8x128xf32>
      %cst_29 = arith.constant 0.000000e+00 : f32
      %50 = vector.broadcast %cst_29 : f32 to vector<8x128xf32>
      %51 = arith.maximumf %49, %50 : vector<8x128xf32>
      %c0_30 = arith.constant 0 : index
      %c0_31 = arith.constant 0 : index
      %52 = vector.load %arg9[%c0_30, %c0_31] : memref<8x128xf32, #tpu.memory_space<vmem>>, vector<8x128xf32>
      tpu.vector_store %arg9[%c0_30, %c0_31], %51 {strides = array<i32>} : memref<8x128xf32, #tpu.memory_space<vmem>>, vector<8x128xf32>,
    } else {
    }
    return
  }
  func.func @transform_0(%arg0: i32, %arg1: i32) -> (i32, i32) {
    %c0_i32 = arith.constant 0 : i32
    %c0_i32_0 = arith.constant 0 : i32
    return %arg0, %c0_i32 : i32, i32
  }
  func.func @transform_1(%arg0: i32, %arg1: i32) -> (i32, i32) {
    %c0_i32 = arith.constant 0 : i32
    %c0_i32_0 = arith.constant 0 : i32
    return %c0_i32, %arg1 : i32, i32
  }
  func.func @transform_2(%arg0: i32, %arg1: i32) -> (i32, i32) {
    %c0_i32 = arith.constant 0 : i32
    %c0_i32_0 = arith.constant 0 : i32
    return %c0_i32, %arg1 : i32, i32
  }
  func.func @transform_3(%arg0: i32, %arg1: i32) -> (i32, i32) {
    %c0_i32 = arith.constant 0 : i32
    %c0_i32_0 = arith.constant 0 : i32
    return %arg1, %c0_i32 : i32, i32
  }
  func.func @transform_4(%arg0: i32, %arg1: i32) -> (i32, i32) {
    %c0_i32 = arith.constant 0 : i32
    %c0_i32_0 = arith.constant 0 : i32
    %c0_i32_1 = arith.constant 0 : i32
    return %c0_i32, %c0_i32_0 : i32, i32
  }
  func.func @transform_5(%arg0: i32, %arg1: i32) -> (i32, i32) {
    %c0_i32 = arith.constant 0 : i32
    %c0_i32_0 = arith.constant 0 : i32
    %c0_i32_1 = arith.constant 0 : i32
    return %c0_i32, %c0_i32_0 : i32, i32
  }
  func.func @transform_6(%arg0: i32, %arg1: i32) -> (i32, i32) {
    %c0_i32 = arith.constant 0 : i32
    %c0_i32_0 = arith.constant 0 : i32
    %c0_i32_1 = arith.constant 0 : i32
    return %c0_i32, %c0_i32_0 : i32, i32
  }
  func.func @transform_7(%arg0: i32, %arg1: i32) -> (i32, i32) {
    %c0_i32 = arith.constant 0 : i32
    %c0_i32_0 = arith.constant 0 : i32
    return %arg0, %c0_i32 : i32, i32
  }
}

</mosaic_0001>

<llo_original>
// kernel: residual_block.1
$region0: #{residual_block.1}
  #allocation0 [shape = 'u32[]', space=smem, size = 0x4, offset = 0x4, fixed_abs, tag = 'smem constant byte address 0x4 - core index']
  #allocation1 [shape = 'u32[144,128]{1,0:T(1,128)}', space=vmem, size = 0x12000, scoped, tag = 'internal scratch']
  #allocation2 [shape = 'f32[8,128]{1,0:T(8,128)}', space=vmem, size = 0x1000, scoped, tag = 'scratch operand']
  %s0 = inlined_call_operand.hbm [shape: f32[8,128], index: 0, kind: input, shape index: {}]
  %s1 = inlined_call_operand.hbm [shape: bf16[128,128], index: 1, kind: input, shape index: {}]
  %s2 = inlined_call_operand.vmem [shape: f32[1,128], index: 2, kind: input, shape index: {}]
  %s3 = inlined_call_operand.hbm [shape: bf16[128,128], index: 3, kind: input, shape index: {}]
  %s4 = inlined_call_operand.vmem [shape: f32[1,128], index: 4, kind: input, shape index: {}]
  %s5 = inlined_call_operand.vmem [shape: f32[1,128], index: 5, kind: input, shape index: {}]
  %s6 = inlined_call_operand.vmem [shape: f32[1,128], index: 6, kind: input, shape index: {}]
  %s7 = inlined_call_operand.hbm [shape: f32[8,128], index: 7, kind: output, shape index: {}]
  %s8 = sld [smem:[#allocation0]]
  $region58: #{residual_block.1} parent=0
    _
  %s10 = ssub.s32 1, %s8
  %s11 = scalar_select 0, %s10, %s8
  $region1: #{residual_block.1} parent=0
    #allocation3 [shape = 'u8[4096]{0}', space=vmem, size = 0x1000, scoped, tag = 'input window, operand 0, single buffered']
    #allocation4 [shape = 's32[1]{0}', space=sflag, size = 0x4, scoped, tag = 'scoped memory for residual_block.1']
    #allocation5 [shape = 's32[1]{0}', space=sflag, size = 0x4, scoped, tag = 'scoped memory for residual_block.1']
    #allocation6 [shape = 'u8[32768]{0}', space=vmem, size = 0x8000, scoped, tag = 'input window, operand 1, single buffered']
    #allocation7 [shape = 's32[1]{0}', space=sflag, size = 0x4, scoped, tag = 'scoped memory for residual_block.1']
    #allocation8 [shape = 'u8[32768]{0}', space=vmem, size = 0x8000, scoped, tag = 'input window, operand 3, single buffered']
    #allocation9 [shape = 'u8[4096]{0}', space=vmem, size = 0x1000, scoped, tag = 'output window, operand 0, single buffered']
    %12 = vsyncpa [#allocation4], 0
    %13 = vsyncpa [#allocation7], 0
    %14 = vsyncpa [#allocation5], 0
    // Predicated region
    $region2: #{residual_block.1} parent=1 // pred_check
      _
    $region3: #{residual_block.1} parent=1 // pred_check_branch
      %16 = sbr.rel (0) target = $region5
    $region4: #{residual_block.1} parent=1 // pred_region
      %s18 = ssub.s32 128, 128
      %19 = vsyncadd [#allocation4], %s18
      %s21 = sshll.u32 [#allocation3], 4
      %s22 = int_to_ptr.vmem [resolvable:$true] %s21
      %24 = dma.hbm_to_vmem [thread:$0]  %s0, 128, %s22, [#allocation4]
    $region5: #{residual_block.1} parent=1 // pred_fallthru
      _
    // Predicated region
    $region6: #{residual_block.1} parent=1 // pred_check
      _
    $region7: #{residual_block.1} parent=1 // pred_check_branch
      %26 = sbr.rel (0) target = $region9
    $region8: #{residual_block.1} parent=1 // pred_region
      %s28 = ssub.s32 1024, 1024
      %29 = vsyncadd [#allocation7], %s28
      %s30 = sshll.u32 [#allocation6], 4
      %s31 = int_to_ptr.vmem [resolvable:$true] %s30
      %36 = dma.hbm_to_vmem [thread:$0]  %s1, 1024, %s31, [#allocation7], 64, 64, 4
    $region9: #{residual_block.1} parent=1 // pred_fallthru
      _
    // Predicated region
    $region10: #{residual_block.1} parent=1 // pred_check
      _
    $region11: #{residual_block.1} parent=1 // pred_check_branch
      %38 = sbr.rel (0) target = $region13
    $region12: #{residual_block.1} parent=1 // pred_region
      _
    $region13: #{residual_block.1} parent=1 // pred_fallthru
      _
    // Predicated region
    $region14: #{residual_block.1} parent=1 // pred_check
      _
    $region15: #{residual_block.1} parent=1 // pred_check_branch
      %40 = sbr.rel (0) target = $region17
    $region16: #{residual_block.1} parent=1 // pred_region
      %s42 = ssub.s32 1024, 1024
      %43 = vsyncadd [#allocation7], %s42
      %s44 = sshll.u32 [#allocation8], 4
      %s45 = int_to_ptr.vmem [resolvable:$true] %s44
      %50 = dma.hbm_to_vmem [thread:$0]  %s3, 1024, %s45, [#allocation7], 64, 64, 4
    $region17: #{residual_block.1} parent=1 // pred_fallthru
      _
    // Predicated region
    $region18: #{residual_block.1} parent=1 // pred_check
      _
    $region19: #{residual_block.1} parent=1 // pred_check_branch
      %52 = sbr.rel (0) target = $region21
    $region20: #{residual_block.1} parent=1 // pred_region
      _
    $region21: #{residual_block.1} parent=1 // pred_fallthru
      _
    // Predicated region
    $region22: #{residual_block.1} parent=1 // pred_check
      _
    $region23: #{residual_block.1} parent=1 // pred_check_branch
      %54 = sbr.rel (0) target = $region25
    $region24: #{residual_block.1} parent=1 // pred_region
      _
    $region25: #{residual_block.1} parent=1 // pred_fallthru
      _
    // Predicated region
    $region26: #{residual_block.1} parent=1 // pred_check
      _
    $region27: #{residual_block.1} parent=1 // pred_check_branch
      %56 = sbr.rel (0) target = $region29
    $region28: #{residual_block.1} parent=1 // pred_region
      _
    $region29: #{residual_block.1} parent=1 // pred_fallthru
      _
    // Predicated region
    $region30: #{residual_block.1} parent=1 // pred_check
      _
    $region31: #{residual_block.1} parent=1 // pred_check_branch
      %58 = sbr.rel (0) target = $region33
    $region32: #{residual_block.1} parent=1 // pred_region
      %59 = dma.done [#allocation4], 128
    $region33: #{residual_block.1} parent=1 // pred_fallthru
      _
    // Predicated region
    $region34: #{residual_block.1} parent=1 // pred_check
      _
    $region35: #{residual_block.1} parent=1 // pred_check_branch
      %61 = sbr.rel (0) target = $region37
    $region36: #{residual_block.1} parent=1 // pred_region
      %62 = dma.done [#allocation7], 1024
    $region37: #{residual_block.1} parent=1 // pred_fallthru
      _
    // Predicated region
    $region38: #{residual_block.1} parent=1 // pred_check
      _
    $region39: #{residual_block.1} parent=1 // pred_check_branch
      %64 = sbr.rel (0) target = $region41
    $region40: #{residual_block.1} parent=1 // pred_region
      %65 = dma.done [#allocation7], 1024
    $region41: #{residual_block.1} parent=1 // pred_fallthru
      _
    %p67 = scmp.eq.s32.totalorder 0, 0
    // Predicated region
    $region42: #{residual_block.1} parent=1 // pred_check
      %p68 = pneg %p67
    $region43: #{residual_block.1} parent=1 // pred_check_branch
      %70 = sbr.rel (%p68) target = $region45
    $region44: #{residual_block.1} parent=1 // pred_region
      %71 = vst [vmem:[#allocation2] sm:$0xff] 0.0
    $region45: #{residual_block.1} parent=1 // pred_fallthru
      _
    %v72 = vld [vmem:[#allocation3] sm:$0xff]
    %v73 = vpack.c.bf16 %v72, %v72
    %v74 = vld [vmem:[#allocation6] sm:$0xf]
    %v75 = vld [vmem:[#allocation6 + $0x4] sm:$0xf]
    %v76 = vld [vmem:[#allocation6 + $0x8] sm:$0xf]
    %v77 = vld [vmem:[#allocation6 + $0xc] sm:$0xf]
    %v78 = vld [vmem:[#allocation6 + $0x10] sm:$0xf]
    %v79 = vld [vmem:[#allocation6 + $0x14] sm:$0xf]
    %v80 = vld [vmem:[#allocation6 + $0x18] sm:$0xf]
    %v81 = vld [vmem:[#allocation6 + $0x1c] sm:$0xf]
    %v82 = vld [vmem:[#allocation6 + $0x20] sm:$0xf]
    %v83 = vld [vmem:[#allocation6 + $0x24] sm:$0xf]
    %v84 = vld [vmem:[#allocation6 + $0x28] sm:$0xf]
    %v85 = vld [vmem:[#allocation6 + $0x2c] sm:$0xf]
    %v86 = vld [vmem:[#allocation6 + $0x30] sm:$0xf]
    %v87 = vld [vmem:[#allocation6 + $0x34] sm:$0xf]
    %v88 = vld [vmem:[#allocation6 + $0x38] sm:$0xf]
    %v89 = vld [vmem:[#allocation6 + $0x3c] sm:$0xf]
    %v90 = vld [vmem:[%s2] sm:$0x1]
    %v92 = vlaneseq
    %v93 = vshrl.u32 %v92, 7
    %v94 = vsub.s32 0, %v93
    %v95 = vrot.slane %v90, %v94
    %v113 = vunpack.c.l.b16 %v74
    %v114 = vunpack.c.l.b16 %v75
    %v115 = vunpack.c.l.b16 %v76
    %v116 = vunpack.c.l.b16 %v77
    %v117 = vunpack.c.l.b16 %v78
    %v118 = vunpack.c.l.b16 %v79
    %v119 = vunpack.c.l.b16 %v80
    %v120 = vunpack.c.l.b16 %v81
    %v121 = vunpack.c.l.b16 %v82
    %v122 = vunpack.c.l.b16 %v83
    %v123 = vunpack.c.l.b16 %v84
    %v124 = vunpack.c.l.b16 %v85
    %v125 = vunpack.c.l.b16 %v86
    %v126 = vunpack.c.l.b16 %v87
    %v127 = vunpack.c.l.b16 %v88
    %v128 = vunpack.c.l.b16 %v89
    %v129 = vpack.c.b16 %v114, %v113
    %v130 = vpack.c.b16 %v116, %v115
    %v131 = vpack.c.b16 %v118, %v117
    %v132 = vpack.c.b16 %v120, %v119
    %v133 = vpack.c.b16 %v122, %v121
    %v134 = vpack.c.b16 %v124, %v123
    %v135 = vpack.c.b16 %v126, %v125
    %v136 = vpack.c.b16 %v128, %v127
    %145 = vmatprep.subr.bf16.mxu0 0
    %146 = vmatpush1.bf16.msra.mxu0 %v129
    %147 = vmatprep.subr.bf16.mxu0 0
    %148 = vmatpush1.bf16.msra.mxu0 %v130
    %149 = vmatprep.subr.bf16.mxu0 0
    %150 = vmatpush1.bf16.msra.mxu0 %v131
    %151 = vmatprep.subr.bf16.mxu0 0
    %152 = vmatpush1.bf16.msra.mxu0 %v132
    %153 = vmatprep.subr.bf16.mxu0 0
    %154 = vmatpush1.bf16.msra.mxu0 %v133
    %155 = vmatprep.subr.bf16.mxu0 0
    %156 = vmatpush1.bf16.msra.mxu0 %v134
    %157 = vmatprep.subr.bf16.mxu0 0
    %158 = vmatpush1.bf16.msra.mxu0 %v135
    %159 = vmatprep.subr.bf16.mxu0 0
    %160 = vmatpush1.bf16.msra.mxu0 %v136
    %161 = vmatprep.subr.bf16.mxu0 0
    %162 = vmatpush1.bf16.msra.mxu0 0
    %163 = vmatprep.subr.bf16.mxu0 0
    %164 = vmatpush1.bf16.msra.mxu0 0
    %165 = vmatprep.subr.bf16.mxu0 0
    %166 = vmatpush1.bf16.msra.mxu0 0
    %167 = vmatprep.subr.bf16.mxu0 0
    %168 = vmatpush1.bf16.msra.mxu0 0
    %169 = vmatprep.subr.bf16.mxu0 0
    %170 = vmatpush1.bf16.msra.mxu0 0
    %171 = vmatprep.subr.bf16.mxu0 0
    %172 = vmatpush1.bf16.msra.mxu0 0
    %173 = vmatprep.subr.bf16.mxu0 0
    %174 = vmatpush1.bf16.msra.mxu0 0
    %175 = vmatprep.subr.bf16.mxu0 0
    %176 = vmatpush1.bf16.msra.mxu0 0
    %177 = vmatprep.mubr.bf16.mxu0 0
    %178 = vmatmul.mubr.bf16.gmra.mrb[0].mxu0 %v73
    %v179 = vpop.f32.mrb[0].mxu0
    %v180 = vadd.f32 %v95, %v179
    %v181 = vpop.f32.mrb[0].mxu0
    %v182 = vpop.f32.mrb[0].mxu0
    %v183 = vpop.f32.mrb[0].mxu0
    %184 = vdwg.mxu0
    %v185 = vmax.f32 %v180, 0.0
    %v186 = vld [vmem:[#allocation2] sm:$0xff]
    %v187 = vpack.c.bf16 %v185, %v185
    %v188 = vld [vmem:[#allocation8] sm:$0xf]
    %v189 = vld [vmem:[#allocation8 + $0x4] sm:$0xf]
    %v190 = vld [vmem:[#allocation8 + $0x8] sm:$0xf]
    %v191 = vld [vmem:[#allocation8 + $0xc] sm:$0xf]
    %v192 = vld [vmem:[#allocation8 + $0x10] sm:$0xf]
    %v193 = vld [vmem:[#allocation8 + $0x14] sm:$0xf]
    %v194 = vld [vmem:[#allocation8 + $0x18] sm:$0xf]
    %v195 = vld [vmem:[#allocation8 + $0x1c] sm:$0xf]
    %v196 = vld [vmem:[#allocation8 + $0x20] sm:$0xf]
    %v197 = vld [vmem:[#allocation8 + $0x24] sm:$0xf]
    %v198 = vld [vmem:[#allocation8 + $0x28] sm:$0xf]
    %v199 = vld [vmem:[#allocation8 + $0x2c] sm:$0xf]
    %v200 = vld [vmem:[#allocation8 + $0x30] sm:$0xf]
    %v201 = vld [vmem:[#allocation8 + $0x34] sm:$0xf]
    %v202 = vld [vmem:[#allocation8 + $0x38] sm:$0xf]
    %v203 = vld [vmem:[#allocation8 + $0x3c] sm:$0xf]
    %v220 = vunpack.c.l.b16 %v188
    %v221 = vunpack.c.l.b16 %v189
    %v222 = vunpack.c.l.b16 %v190
    %v223 = vunpack.c.l.b16 %v191
    %v224 = vunpack.c.l.b16 %v192
    %v225 = vunpack.c.l.b16 %v193
    %v226 = vunpack.c.l.b16 %v194
    %v227 = vunpack.c.l.b16 %v195
    %v228 = vunpack.c.l.b16 %v196
    %v229 = vunpack.c.l.b16 %v197
    %v230 = vunpack.c.l.b16 %v198
    %v231 = vunpack.c.l.b16 %v199
    %v232 = vunpack.c.l.b16 %v200
    %v233 = vunpack.c.l.b16 %v201
    %v234 = vunpack.c.l.b16 %v202
    %v235 = vunpack.c.l.b16 %v203
    %v236 = vpack.c.b16 %v221, %v220
    %v237 = vpack.c.b16 %v223, %v222
    %v238 = vpack.c.b16 %v225, %v224
    %v239 = vpack.c.b16 %v227, %v226
    %v240 = vpack.c.b16 %v229, %v228
    %v241 = vpack.c.b16 %v231, %v230
    %v242 = vpack.c.b16 %v233, %v232
    %v243 = vpack.c.b16 %v235, %v234
    %252 = vmatprep.subr.bf16.mxu0 0
    %253 = vmatpush1.bf16.msra.mxu0 %v236
    %254 = vmatprep.subr.bf16.mxu0 0
    %255 = vmatpush1.bf16.msra.mxu0 %v237
    %256 = vmatprep.subr.bf16.mxu0 0
    %257 = vmatpush1.bf16.msra.mxu0 %v238
    %258 = vmatprep.subr.bf16.mxu0 0
    %259 = vmatpush1.bf16.msra.mxu0 %v239
    %260 = vmatprep.subr.bf16.mxu0 0
    %261 = vmatpush1.bf16.msra.mxu0 %v240
    %262 = vmatprep.subr.bf16.mxu0 0
    %263 = vmatpush1.bf16.msra.mxu0 %v241
    %264 = vmatprep.subr.bf16.mxu0 0
    %265 = vmatpush1.bf16.msra.mxu0 %v242
    %266 = vmatprep.subr.bf16.mxu0 0
    %267 = vmatpush1.bf16.msra.mxu0 %v243
    %268 = vmatprep.subr.bf16.mxu0 0
    %269 = vmatpush1.bf16.msra.mxu0 0
    %270 = vmatprep.subr.bf16.mxu0 0
    %271 = vmatpush1.bf16.msra.mxu0 0
    %272 = vmatprep.subr.bf16.mxu0 0
    %273 = vmatpush1.bf16.msra.mxu0 0
    %274 = vmatprep.subr.bf16.mxu0 0
    %275 = vmatpush1.bf16.msra.mxu0 0
    %276 = vmatprep.subr.bf16.mxu0 0
    %277 = vmatpush1.bf16.msra.mxu0 0
    %278 = vmatprep.subr.bf16.mxu0 0
    %279 = vmatpush1.bf16.msra.mxu0 0
    %280 = vmatprep.subr.bf16.mxu0 0
    %281 = vmatpush1.bf16.msra.mxu0 0
    %282 = vmatprep.subr.bf16.mxu0 0
    %283 = vmatpush1.bf16.msra.mxu0 0
    %284 = vmatprep.mubr.bf16.mxu0 0
    %285 = vmatmul.mubr.bf16.gmra.mrb[0].mxu0 %v187
    %v286 = vpop.f32.mrb[0].mxu0
    %v287 = vadd.f32 0.0, %v286
    %v288 = vpop.f32.mrb[0].mxu0
    %v289 = vpop.f32.mrb[0].mxu0
    %v290 = vpop.f32.mrb[0].mxu0
    %291 = vdwg.mxu0
    %v292 = vadd.f32 %v186, %v287
    %293 = vst [vmem:[#allocation2] sm:$0xff] %v292
    // Predicated region
    $region46: #{residual_block.1} parent=1 // pred_check
      %p294 = pneg %p67
    $region47: #{residual_block.1} parent=1 // pred_check_branch
      %296 = sbr.rel (%p294) target = $region49
    $region48: #{residual_block.1} parent=1 // pred_region
      %v297 = vld [vmem:[#allocation2] sm:$0xff]
      %v298 = vld [vmem:[%s4] sm:$0x1]
      %v300 = vlaneseq
      %v301 = vshrl.u32 %v300, 7
      %v302 = vsub.s32 0, %v301
      %v303 = vrot.slane %v298, %v302
      %v305 = vadd.f32 %v297, %v303
      %v306 = vadd.f32 %v305, %v72
      %307 = vadd.xlane.f32.xlu0 %v306
      %v308 = vpop.xlane.xlu0 %307
      %v309 = vrcp.pop 128.0
      %v310 = vmul.f32 %v308, %v309
      %v311 = vmul.f32 %v306, %v306
      %312 = vadd.xlane.f32.xlu0 %v311
      %v313 = vpop.xlane.xlu0 %312
      %v314 = vmul.f32 %v313, %v309
      %v315 = vmul.f32 %v310, %v310
      %v316 = vsub.f32 %v314, %v315
      %v317 = vsub.f32 %v306, %v310
      %v318 = vadd.f32 %v316, 1e-05
      %v319 = vrsqrt.pop %v318
      %v320 = vmul.f32 %v317, %v319
      %v321 = vld [vmem:[%s5] sm:$0x1]
      %v323 = vlaneseq
      %v324 = vshrl.u32 %v323, 7
      %v325 = vsub.s32 0, %v324
      %v326 = vrot.slane %v321, %v325
      %v328 = vmul.f32 %v320, %v326
      %v329 = vld [vmem:[%s6] sm:$0x1]
      %v331 = vlaneseq
      %v332 = vshrl.u32 %v331, 7
      %v333 = vsub.s32 0, %v332
      %v334 = vrot.slane %v329, %v333
      %v336 = vadd.f32 %v328, %v334
      %v337 = vmax.f32 %v336, 0.0
      %338 = vst [vmem:[#allocation9] sm:$0xff] %v337
    $region49: #{residual_block.1} parent=1 // pred_fallthru
      _
    // Predicated region
    $region50: #{residual_block.1} parent=1 // pred_check
      _
    $region51: #{residual_block.1} parent=1 // pred_check_branch
      %340 = sbr.rel (0) target = $region53
    $region52: #{residual_block.1} parent=1 // pred_region
      %s342 = ssub.s32 128, 128
      %343 = vsyncadd [#allocation5], %s342
      %s345 = sshll.u32 [#allocation9], 4
      %s346 = int_to_ptr.vmem [resolvable:$true] %s345
      %348 = dma.vmem_to_hbm [thread:$0]  %s346, 128, %s7, [#allocation5]
    $region53: #{residual_block.1} parent=1 // pred_fallthru
      _
    // Predicated region
    $region54: #{residual_block.1} parent=1 // pred_check
      _
    $region55: #{residual_block.1} parent=1 // pred_check_branch
      %350 = sbr.rel (0) target = $region57
    $region56: #{residual_block.1} parent=1 // pred_region
      %351 = dma.done [#allocation5], 128
    $region57: #{residual_block.1} parent=1 // pred_fallthru
      _
    %352 = vsyncpa [#allocation4], 1
    %353 = vsyncpa [#allocation7], 1
    %354 = vsyncpa [#allocation5], 1

</llo_original>
